<compile_context>
chip_gen: v7x
topology: tpu7x:2x2x1
jax: 0.10.0
libtpu: 0.0.40
codegen_flags: <defaults>
</compile_context>

<pallas_src>
import jax
import jax.numpy as jnp
from jax.experimental import pallas as pl
from jax.experimental.pallas import tpu as pltpu


LANE = 128                       # TPU lane width (last-dim vreg extent)
_MAX_BLOCK_SAMPLES = 256 * 1024  # 2 MiB f32 per (2, tm, 128) tile; 8 MiB total
                                 # double-buffered in+out -> fits v5e's 16 MiB
                                 # scoped-VMEM default, well under v6e/v7x.


def _msd_kernel(a_ref, x_ref, o_ref):
    # A scalars straight from SMEM (row-major: [a00, a01, a10, a11]).
    a00 = a_ref[0]
    a01 = a_ref[1]
    a10 = a_ref[2]
    a11 = a_ref[3]
    # Dense (tm, 128) tiles: state row 0 and state row 1.
    x0 = x_ref[0]
    x1 = x_ref[1]
    # Pure VPU broadcast-FMA; hides entirely under the HBM streaming DMA.
    o_ref[0] = (a00 * x0 + a01 * x1).astype(o_ref.dtype)
    o_ref[1] = (a10 * x0 + a11 * x1).astype(o_ref.dtype)


def mass_spring_damper_forward(t, x, A):
    """dx = A @ x for the 2-state mass-spring-damper (memory-bound streaming).

    `t` is accepted for ODE-solver API parity but (as in the PyTorch module)
    is unused by the dynamics.
    """
    del t  # unused, matches the reference forward(t, x)
    S, N = x.shape
    assert S == 2 and A.shape == (S, S)

    a_flat = A.reshape(-1).astype(jnp.float32)  # -> SMEM scalars

    # Lane-dense layout: (2, N) -> (2, M, 128).
    if N <= _MAX_BLOCK_SAMPLES:
        tm = pl.cdiv(N, LANE)                # single block along M (full dim)
    else:
        tm = _MAX_BLOCK_SAMPLES // LANE      # 2048, a multiple of 8
    block_samples = tm * LANE
    Np = pl.cdiv(N, block_samples) * block_samples
    x_p = jnp.pad(x, ((0, 0), (0, Np - N))) if Np != N else x
    Mp = Np // LANE
    x3 = x_p.reshape(S, Mp, LANE)

    grid = (Mp // tm,)
    out3 = pl.pallas_call(
        _msd_kernel,
        out_shape=jax.ShapeDtypeStruct((S, Mp, LANE), x.dtype),
        grid_spec=pltpu.PrefetchScalarGridSpec(
            num_scalar_prefetch=0,
            grid=grid,
            in_specs=[
                # A: whole (4,) array resident in SMEM — no VMEM tile, no
                # per-step DMA descriptor for it.
                pl.BlockSpec(memory_space=pltpu.MemorySpace.SMEM),
                # x tile: (2, tm, 128), fully lane-dense, auto double-buffered.
                pl.BlockSpec((S, tm, LANE), lambda j: (0, j, 0)),
            ],
            out_specs=pl.BlockSpec((S, tm, LANE), lambda j: (0, j, 0)),
        ),
        compiler_params=pltpu.CompilerParams(
            dimension_semantics=("parallel",),   # shard grid across TCs (v7x)
        ),
        # Pure streaming op: 6 flops and 16 bytes of HBM traffic per sample.
        cost_estimate=pl.CostEstimate(
            flops=6 * Np, transcendentals=0, bytes_accessed=16 * Np),
    )(a_flat, x3)

    out = out3.reshape(S, Np)
    return out if Np == N else out[:, :N]


def make_A(m=1.0, k=1.0, b=0.5):
    # Deterministic parameter construction mirroring the module's __init__.
    return jnp.array([[0.0, 1.0], [-k / m, -b / m]], dtype=jnp.float32)


if __name__ == "__main__":
    m, k, b = 1.0, 1.0, 0.5
    A = make_A(m, k, b)
    t = jnp.float32(0.0)  # unused by the dynamics, kept for API parity

    # Small deterministic input: 2 state dims (position, velocity) x 256 samples.
    key = jax.random.PRNGKey(0)
    x = jax.random.normal(key, (2, 256), dtype=jnp.float32)

    dx = mass_spring_damper_forward(t, x, A)
    dx = jax.block_until_ready(dx)
    ref = A @ x
    assert dx.shape == (2, 256)
    assert jnp.allclose(dx, ref, atol=1e-6, rtol=1e-6)

    # Ragged sample count (exercises the pad + slice path; no divisibility
    # requirement on the sample axis anymore).
    x2 = jax.random.normal(jax.random.PRNGKey(0), (2, 200), dtype=jnp.float32)
    dx2 = jax.block_until_ready(mass_spring_damper_forward(t, x2, A))
    assert dx2.shape == (2, 200)
    assert jnp.allclose(dx2, A @ x2, atol=1e-6, rtol=1e-6)

    print("KERNEL_OK")
</pallas_src>

<mosaic_0001>
module attributes {stable_mosaic.version = 11 : i64} {
  func.func @_msd_kernel(%arg0: i32, %arg1: memref<4xf32, #tpu.memory_space<smem>>, %arg2: memref<2x2x128xf32, #tpu.memory_space<vmem>>, %arg3: memref<2x2x128xf32, #tpu.memory_space<vmem>>) attributes {dimension_semantics = [#tpu.dimension_semantics<parallel>], iteration_bounds = array<i64: 1>, scalar_prefetch = 0 : i64, scratch_operands = 0 : i64, tpu.core_type = #tpu.core_type<tc>, window_params = [{transform_indices = @transform_0, window_bounds = array<i64: 4>}, {transform_indices = @transform_1, window_bounds = array<i64: 2, 2, 128>}, {transform_indices = @transform_2, window_bounds = array<i64: 2, 2, 128>}]} {
    %c0 = arith.constant 0 : index
    %0 = memref.load %arg1[%c0] : memref<4xf32, #tpu.memory_space<smem>>
    %c1 = arith.constant 1 : index
    %1 = memref.load %arg1[%c1] : memref<4xf32, #tpu.memory_space<smem>>
    %c2 = arith.constant 2 : index
    %2 = memref.load %arg1[%c2] : memref<4xf32, #tpu.memory_space<smem>>
    %c3 = arith.constant 3 : index
    %3 = memref.load %arg1[%c3] : memref<4xf32, #tpu.memory_space<smem>>
    %c0_0 = arith.constant 0 : index
    %c0_1 = arith.constant 0 : index
    %c0_2 = arith.constant 0 : index
    %4 = vector.load %arg2[%c0_0, %c0_1, %c0_2] : memref<2x2x128xf32, #tpu.memory_space<vmem>>, vector<1x2x128xf32>
    %5 = vector.shape_cast %4 : vector<1x2x128xf32> to vector<2x128xf32>
    %c1_3 = arith.constant 1 : index
    %c0_4 = arith.constant 0 : index
    %c0_5 = arith.constant 0 : index
    %6 = vector.load %arg2[%c1_3, %c0_4, %c0_5] : memref<2x2x128xf32, #tpu.memory_space<vmem>>, vector<1x2x128xf32>
    %7 = vector.shape_cast %6 : vector<1x2x128xf32> to vector<2x128xf32>
    %8 = vector.broadcast %0 : f32 to vector<2x128xf32>
    %9 = arith.mulf %8, %5 : vector<2x128xf32>
    %10 = vector.broadcast %1 : f32 to vector<2x128xf32>
    %11 = arith.mulf %10, %7 : vector<2x128xf32>
    %12 = arith.addf %9, %11 : vector<2x128xf32>
    %c0_6 = arith.constant 0 : index
    %c0_7 = arith.constant 0 : index
    %c0_8 = arith.constant 0 : index
    %13 = vector.load %arg3[%c0_6, %c0_7, %c0_8] : memref<2x2x128xf32, #tpu.memory_space<vmem>>, vector<1x2x128xf32>
    %14 = vector.shape_cast %13 : vector<1x2x128xf32> to vector<2x128xf32>
    %15 = vector.shape_cast %12 : vector<2x128xf32> to vector<1x2x128xf32>
    tpu.vector_store %arg3[%c0_6, %c0_7, %c0_8], %15 {strides = array<i32>} : memref<2x2x128xf32, #tpu.memory_space<vmem>>, vector<1x2x128xf32>,
    %16 = vector.broadcast %2 : f32 to vector<2x128xf32>
    %17 = arith.mulf %16, %5 : vector<2x128xf32>
    %18 = vector.broadcast %3 : f32 to vector<2x128xf32>
    %19 = arith.mulf %18, %7 : vector<2x128xf32>
    %20 = arith.addf %17, %19 : vector<2x128xf32>
    %c1_9 = arith.constant 1 : index
    %c0_10 = arith.constant 0 : index
    %c0_11 = arith.constant 0 : index
    %21 = vector.load %arg3[%c1_9, %c0_10, %c0_11] : memref<2x2x128xf32, #tpu.memory_space<vmem>>, vector<1x2x128xf32>
    %22 = vector.shape_cast %21 : vector<1x2x128xf32> to vector<2x128xf32>
    %23 = vector.shape_cast %20 : vector<2x128xf32> to vector<1x2x128xf32>
    tpu.vector_store %arg3[%c1_9, %c0_10, %c0_11], %23 {strides = array<i32>} : memref<2x2x128xf32, #tpu.memory_space<vmem>>, vector<1x2x128xf32>,
    return
  }
  func.func @transform_0(%arg0: i32) -> i32 {
    %c0_i32 = arith.constant 0 : i32
    %c0_i32_0 = arith.constant 0 : i32
    return %c0_i32 : i32
  }
  func.func @transform_1(%arg0: i32) -> (i32, i32, i32) {
    %c0_i32 = arith.constant 0 : i32
    %c0_i32_0 = arith.constant 0 : i32
    %c0_i32_1 = arith.constant 0 : i32
    return %c0_i32, %arg0, %c0_i32_0 : i32, i32, i32
  }
  func.func @transform_2(%arg0: i32) -> (i32, i32, i32) {
    %c0_i32 = arith.constant 0 : i32
    %c0_i32_0 = arith.constant 0 : i32
    %c0_i32_1 = arith.constant 0 : i32
    return %c0_i32, %arg0, %c0_i32_0 : i32, i32, i32
  }
}

</mosaic_0001>

<llo_original>
// kernel: tpu_custom_call.1
$region0: #{tpu_custom_call.1}
  #allocation0 [shape = 'u32[]', space=smem, size = 0x4, offset = 0x4, fixed_abs, tag = 'smem constant byte address 0x4 - core index']
  #allocation1 [shape = 'u32[144,128]{1,0:T(1,128)}', space=vmem, size = 0x12000, scoped, tag = 'internal scratch']
  %s0 = inlined_call_operand.hbm [shape: f32[4], index: 0, kind: input, shape index: {}]
  %s1 = inlined_call_operand.hbm [shape: f32[2,2,128], index: 1, kind: input, shape index: {}]
  %s2 = inlined_call_operand.hbm [shape: f32[2,2,128], index: 2, kind: output, shape index: {}]
  %s3 = sld [smem:[#allocation0]]
  $region26: #{tpu_custom_call.1} parent=0
    _
  %s5 = ssub.s32 1, %s3
  %s6 = scalar_select 0, %s5, %s3
  $region1: #{tpu_custom_call.1} parent=0
    #allocation2 [shape = 'u8[512]{0}', space=smem, size = 0x200, scoped, tag = 'input window, operand 0, single buffered']
    #allocation3 [shape = 's32[1]{0}', space=sflag, size = 0x4, scoped, tag = 'scoped memory for tpu_custom_call.1']
    #allocation4 [shape = 's32[1]{0}', space=sflag, size = 0x4, scoped, tag = 'scoped memory for tpu_custom_call.1']
    #allocation5 [shape = 's32[1]{0}', space=sflag, size = 0x4, scoped, tag = 'scoped memory for tpu_custom_call.1']
    #allocation6 [shape = 'u8[2048]{0}', space=vmem, size = 0x800, scoped, tag = 'input window, operand 1, single buffered']
    #allocation7 [shape = 'u8[2048]{0}', space=vmem, size = 0x800, scoped, tag = 'output window, operand 0, single buffered']
    %7 = vsyncpa [#allocation5], 0
    %8 = vsyncpa [#allocation3], 0
    %9 = vsyncpa [#allocation4], 0
    // Predicated region
    $region2: #{tpu_custom_call.1} parent=1 // pred_check
      _
    $region3: #{tpu_custom_call.1} parent=1 // pred_check_branch
      %11 = sbr.rel (0) target = $region5
    $region4: #{tpu_custom_call.1} parent=1 // pred_region
      %s13 = ssub.s32 16, 16
      %14 = vsyncadd [#allocation5], %s13
      %17 = dma.hbm_to_smem %s0, 16, [#allocation2], [#allocation5]
    $region5: #{tpu_custom_call.1} parent=1 // pred_fallthru
      _
    // Predicated region
    $region6: #{tpu_custom_call.1} parent=1 // pred_check
      _
    $region7: #{tpu_custom_call.1} parent=1 // pred_check_branch
      %19 = sbr.rel (0) target = $region9
    $region8: #{tpu_custom_call.1} parent=1 // pred_region
      %s21 = ssub.s32 64, 64
      %22 = vsyncadd [#allocation3], %s21
      %s23 = sshll.u32 [#allocation6], 4
      %s24 = int_to_ptr.vmem [resolvable:$true] %s23
      %29 = dma.hbm_to_vmem [thread:$0]  %s1, 64, %s24, [#allocation3], 32, 32, 2
    $region9: #{tpu_custom_call.1} parent=1 // pred_fallthru
      _
    // Predicated region
    $region10: #{tpu_custom_call.1} parent=1 // pred_check
      _
    $region11: #{tpu_custom_call.1} parent=1 // pred_check_branch
      %31 = sbr.rel (0) target = $region13
    $region12: #{tpu_custom_call.1} parent=1 // pred_region
      %32 = dma.done [#allocation5], 16
    $region13: #{tpu_custom_call.1} parent=1 // pred_fallthru
      _
    // Predicated region
    $region14: #{tpu_custom_call.1} parent=1 // pred_check
      _
    $region15: #{tpu_custom_call.1} parent=1 // pred_check_branch
      %34 = sbr.rel (0) target = $region17
    $region16: #{tpu_custom_call.1} parent=1 // pred_region
      %35 = dma.done [#allocation3], 64
    $region17: #{tpu_custom_call.1} parent=1 // pred_fallthru
      _
    %36 = sfence
    %s37 = sld [smem:[#allocation2]]
    %s38 = sld [smem:[#allocation2 + $0x1]]
    %s39 = sld [smem:[#allocation2 + $0x2]]
    %s40 = sld [smem:[#allocation2 + $0x3]]
    %v41 = vld [vmem:[#allocation6] sm:$0x3]
    %s42 = scalar_lea.vmem [#allocation6], 2
    %v43 = vld [vmem:[%s42] sm:$0x3]
    %v44 = vstv %s37
    %v45 = vmul.f32 %v44, %v41
    %v46 = vstv %s38
    %v47 = vmul.f32 %v46, %v43
    %v48 = vadd.f32 %v45, %v47
    %49 = vst [vmem:[#allocation7] sm:$0x3] %v48
    %v50 = vstv %s39
    %v51 = vmul.f32 %v50, %v41
    %v52 = vstv %s40
    %v53 = vmul.f32 %v52, %v43
    %v54 = vadd.f32 %v51, %v53
    %s55 = scalar_lea.vmem [#allocation7], 2
    %56 = vst [vmem:[%s55] sm:$0x3] %v54
    // Predicated region
    $region18: #{tpu_custom_call.1} parent=1 // pred_check
      _
    $region19: #{tpu_custom_call.1} parent=1 // pred_check_branch
      %58 = sbr.rel (0) target = $region21
    $region20: #{tpu_custom_call.1} parent=1 // pred_region
      %s60 = ssub.s32 64, 64
      %61 = vsyncadd [#allocation4], %s60
      %s62 = sshll.u32 [#allocation7], 4
      %s63 = int_to_ptr.vmem [resolvable:$true] %s62
      %68 = dma.vmem_to_hbm [thread:$0]  %s63, 64, %s2, [#allocation4], 32, 32, 2
    $region21: #{tpu_custom_call.1} parent=1 // pred_fallthru
      _
    // Predicated region
    $region22: #{tpu_custom_call.1} parent=1 // pred_check
      _
    $region23: #{tpu_custom_call.1} parent=1 // pred_check_branch
      %70 = sbr.rel (0) target = $region25
    $region24: #{tpu_custom_call.1} parent=1 // pred_region
      %71 = dma.done [#allocation4], 64
    $region25: #{tpu_custom_call.1} parent=1 // pred_fallthru
      _
    %72 = vsyncpa [#allocation3], 1
    %73 = vsyncpa [#allocation4], 1
    %74 = vsyncpa [#allocation5], 1

</llo_original>
